<compile_context>
chip_gen: v7x
topology: tpu7x:2x2x1
jax: 0.10.0
libtpu: 0.0.40
codegen_flags: <defaults>
</compile_context>

<pallas_src>
import functools

import jax
import jax.numpy as jnp
from jax import lax
from jax.experimental import pallas as pl
from jax.experimental.pallas import tpu as pltpu


def _tokenizer_kernel(lhs_ref, w_ref, o_ref, cpad_ref, wpool_ref, *,
                      B, Hout, Wout, Po, Cout, Kpad, PADL):
    """One batch-block per grid step.

    lhs_ref  : (B, Hout*Wout, Kpad)       bf16 im2col activations (K*K*Cin zero-padded to Kpad)
    w_ref    : (Kpad, Cout)               bf16 conv weights in im2col layout (rows zero-padded)
    o_ref    : (B, Po*Po, Cout)           f32 final tokenizer output (already flattened+transposed)
    cpad_ref : (B, Hout, Wout+PADL, Cout) f32 conv result, -inf columns on the left (pool padding)
    wpool_ref: (B, Hout+1, Po, Cout)      f32 after W-direction pooling, -inf top row (pool padding)
    """
    neg_inf = -jnp.inf

    # ---- Conv2d as a single MXU matmul over the whole batch block -----------
    lhs = lhs_ref[...].reshape(B * Hout * Wout, Kpad)            # bf16
    conv = jnp.dot(lhs, w_ref[...],
                   preferred_element_type=jnp.float32)           # (B*Hout*Wout, Cout) f32

    # -inf left border (aligned 8-sublane slab); interior fully overwritten.
    cpad_ref[:, :, 0:PADL, :] = jnp.full((B, Hout, PADL, Cout), neg_inf, jnp.float32)
    cpad_ref[:, :, PADL:PADL + Wout, :] = conv.reshape(B, Hout, Wout, Cout)

    # ---- MaxPool2d(kernel=3, stride=2, pad=1), separable W-pass then H-pass --
    # W-pass: three sublane-strided reads + two whole-tile maximums.
    w_left = cpad_ref[:, :, pl.ds(PADL - 1, Po, stride=2), :]    # orig cols 2j-1 (j=0 -> -inf pad)
    w_cent = cpad_ref[:, :, pl.ds(PADL, Po, stride=2), :]        # orig cols 2j
    w_rght = cpad_ref[:, :, pl.ds(PADL + 1, Po, stride=2), :]    # orig cols 2j+1
    wpool_ref[:, 0:1, :, :] = jnp.full((B, 1, Po, Cout), neg_inf, jnp.float32)
    wpool_ref[:, 1:Hout + 1, :, :] = jnp.maximum(jnp.maximum(w_left, w_cent), w_rght)

    # H-pass: Po row-triple maxima, stored directly as output tokens t = i*Po + j.
    for i in range(Po):
        r0 = wpool_ref[:, 2 * i, :, :]
        r1 = wpool_ref[:, 2 * i + 1, :, :]
        r2 = wpool_ref[:, 2 * i + 2, :, :]
        o_ref[:, i * Po:(i + 1) * Po, :] = jnp.maximum(jnp.maximum(r0, r1), r2)


def _pick_batch_block(n, max_block=8):
    """Largest divisor of n (<= max_block) that still leaves >= 2 grid steps,
    so v7x's two TensorCores both get work via the 'parallel' batch axis."""
    cands = [b for b in range(1, min(n, max_block) + 1) if n % b == 0 and n // b >= 2]
    return max(cands) if cands else n


def tokenizer_forward(x_nchw, w_oihw, *, conv_stride=1, conv_pad=1,
                      pool_kernel=3, pool_stride=2, pool_pad=1, batch_block=None):
    """Tokenizer.forward: returns (N, seq_len, n_output_channels) in float32."""
    N, Cin, H, W = x_nchw.shape
    Cout, Cin_w, K, K2 = w_oihw.shape
    assert Cin == Cin_w and K == K2
    assert conv_stride == 1, "kernel specialized to the module config (stride=1)"
    assert (pool_kernel, pool_stride, pool_pad) == (3, 2, 1), \
        "kernel specialized to the MaxPool2d(3, 2, 1) module defaults"

    Hout = (H + 2 * conv_pad - K) // conv_stride + 1
    Wout = (W + 2 * conv_pad - K) // conv_stride + 1
    Po = (Hout + 2 * pool_pad - pool_kernel) // pool_stride + 1
    assert Hout == Wout and (Wout + 2 * pool_pad - pool_kernel) // pool_stride + 1 == Po

    KKC = K * K * Cin
    Kpad = max(128, ((KKC + 127) // 128) * 128)   # lane-dense contraction dim
    PADL = 8                                      # aligned -inf border for the W-pool

    # ---- plain-JAX glue: NHWC + zero-pad + im2col (lane axis = K*K*Cin) ------
    x_nhwc = jnp.transpose(x_nchw, (0, 2, 3, 1)).astype(jnp.float32)
    xp = jnp.pad(x_nhwc, ((0, 0), (conv_pad, conv_pad), (conv_pad, conv_pad), (0, 0)))
    taps = [xp[:, dy:dy + Hout, dx:dx + Wout, :]
            for dy in range(K) for dx in range(K)]
    lhs = jnp.stack(taps, axis=3).reshape(N, Hout * Wout, KKC)
    lhs = jnp.pad(lhs, ((0, 0), (0, 0), (0, Kpad - KKC))).astype(jnp.bfloat16)

    w_col = jnp.transpose(w_oihw, (2, 3, 1, 0)).reshape(KKC, Cout)
    w_col = jnp.pad(w_col, ((0, Kpad - KKC), (0, 0))).astype(jnp.bfloat16)

    bn = batch_block if batch_block is not None else _pick_batch_block(N)
    assert N % bn == 0

    kernel = functools.partial(_tokenizer_kernel, B=bn, Hout=Hout, Wout=Wout,
                               Po=Po, Cout=Cout, Kpad=Kpad, PADL=PADL)

    # VMEM per step (bn=8 worst case here): ~0.6 MiB lhs (double-buffered) +
    # ~0.6 MiB scratch -- far below the 16/32 MiB scoped defaults on v5e/v6e/v7x,
    # so no vmem_limit_bytes override is needed.
    out = pl.pallas_call(
        kernel,
        out_shape=jax.ShapeDtypeStruct((N, Po * Po, Cout), jnp.float32),
        grid_spec=pltpu.PrefetchScalarGridSpec(
            num_scalar_prefetch=0,
            grid=(N // bn,),
            in_specs=[
                pl.BlockSpec((bn, Hout * Wout, Kpad), lambda g: (g, 0, 0)),
                pl.BlockSpec((Kpad, Cout), lambda g: (0, 0)),
            ],
            out_specs=pl.BlockSpec((bn, Po * Po, Cout), lambda g: (g, 0, 0)),
            scratch_shapes=[
                pltpu.VMEM((bn, Hout, Wout + PADL, Cout), jnp.float32),
                pltpu.VMEM((bn, Hout + 1, Po, Cout), jnp.float32),
            ],
        ),
        compiler_params=pltpu.CompilerParams(
            dimension_semantics=("parallel",)),
    )(lhs, w_col)

    # Output is already (N, Po*Po, Cout) == flatten(2,3).transpose(-2,-1).
    return out


if __name__ == "__main__":
    key = jax.random.PRNGKey(0)
    kx, kw = jax.random.split(key)

    # Module config: kernel_size=[3], stride=[1], padding=[1], n_conv_layers=1,
    # n_input_channels=4, n_output_channels=32, max_pool=[True], downsample=1,
    # norm=False, activation=None, conv_bias=False.
    N, Cin, H, W = 2, 4, 16, 16
    Cout, K = 32, 3

    x = jax.random.normal(kx, (N, Cin, H, W), dtype=jnp.float32)
    # Deterministic kaiming_normal_ (fan_in, gain=sqrt(2)) for the conv weight.
    fan_in = Cin * K * K
    w = jax.random.normal(kw, (Cout, Cin, K, K), dtype=jnp.float32) * jnp.sqrt(2.0 / fan_in)

    out = jax.block_until_ready(tokenizer_forward(x, w))

    # Plain-JAX reference.  The kernel feeds the MXU bf16 activations/weights
    # (f32 accumulation), so quantize the reference inputs identically; the
    # remaining difference is only accumulation order (~1e-6).
    xq = x.astype(jnp.bfloat16).astype(jnp.float32)
    wq = w.astype(jnp.bfloat16).astype(jnp.float32)
    conv = lax.conv_general_dilated(
        xq, wq, window_strides=(1, 1), padding=((1, 1), (1, 1)),
        dimension_numbers=("NCHW", "OIHW", "NCHW"),
        precision=lax.Precision.HIGHEST)
    pooled = lax.reduce_window(
        conv, -jnp.inf, lax.max,
        window_dimensions=(1, 1, 3, 3), window_strides=(1, 1, 2, 2),
        padding=((0, 0), (0, 0), (1, 1), (1, 1)))
    ref = pooled.reshape(N, Cout, -1).transpose(0, 2, 1)

    assert out.shape == (N, 8 * 8, Cout), out.shape
    if not jnp.allclose(out, ref, atol=2e-2, rtol=2e-2):
        max_err = jnp.max(jnp.abs(out - ref))
        raise AssertionError(
            f"Pallas tokenizer output mismatches JAX reference (max err {max_err})")

    print("KERNEL_OK")
</pallas_src>

<mosaic_0001>
module attributes {stable_mosaic.version = 11 : i64} {
  func.func @_tokenizer_kernel(%arg0: i32, %arg1: memref<1x256x128xbf16, #tpu.memory_space<vmem>>, %arg2: memref<128x32xbf16, #tpu.memory_space<vmem>>, %arg3: memref<1x64x32xf32, #tpu.memory_space<vmem>>, %arg4: memref<1x16x24x32xf32, #tpu.memory_space<vmem>>, %arg5: memref<1x17x8x32xf32, #tpu.memory_space<vmem>>) attributes {dimension_semantics = [#tpu.dimension_semantics<parallel>], iteration_bounds = array<i64: 2>, scalar_prefetch = 0 : i64, scratch_operands = 2 : i64, tpu.core_type = #tpu.core_type<tc>, window_params = [{transform_indices = @transform_0, window_bounds = array<i64: 1, 256, 128>}, {pipeline_mode = #tpu.pipeline_mode<synchronous>, transform_indices = @transform_1, window_bounds = array<i64: 128, 32>}, {transform_indices = @transform_2, window_bounds = array<i64: 1, 64, 32>}]} {
    %c0 = arith.constant 0 : index
    %c0_0 = arith.constant 0 : index
    %c0_1 = arith.constant 0 : index
    %0 = vector.load %arg1[%c0, %c0_0, %c0_1] : memref<1x256x128xbf16, #tpu.memory_space<vmem>>, vector<1x256x128xbf16>
    %1 = vector.shape_cast %0 : vector<1x256x128xbf16> to vector<256x128xbf16>
    %c0_2 = arith.constant 0 : index
    %c0_3 = arith.constant 0 : index
    %2 = vector.load %arg2[%c0_2, %c0_3] : memref<128x32xbf16, #tpu.memory_space<vmem>>, vector<128x32xbf16>
    %cst = arith.constant dense<0.000000e+00> : vector<256x32xf32>
    %3 = tpu.matmul %1, %2, %cst {dimension_numbers = #tpu.dot_dimension_numbers<[1], [0], [0], [1], [0, 0, 1, 1], [], []>} : vector<256x128xbf16>, vector<128x32xbf16>, vector<256x32xf32> -> vector<256x32xf32>
    %cst_4 = arith.constant 0xFF800000 : f32
    %4 = vector.broadcast %cst_4 : f32 to vector<1x16x8x32xf32>
    %c0_5 = arith.constant 0 : index
    %c0_6 = arith.constant 0 : index
    %c0_7 = arith.constant 0 : index
    %c0_8 = arith.constant 0 : index
    %5 = vector.load %arg4[%c0_5, %c0_6, %c0_7, %c0_8] : memref<1x16x24x32xf32, #tpu.memory_space<vmem>>, vector<1x16x8x32xf32>
    tpu.vector_store %arg4[%c0_5, %c0_6, %c0_7, %c0_8], %4 {strides = array<i32>} : memref<1x16x24x32xf32, #tpu.memory_space<vmem>>, vector<1x16x8x32xf32>,
    %6 = vector.shape_cast %3 : vector<256x32xf32> to vector<1x16x16x32xf32>
    %c0_9 = arith.constant 0 : index
    %c0_10 = arith.constant 0 : index
    %c8 = arith.constant 8 : index
    %c0_11 = arith.constant 0 : index
    %7 = vector.load %arg4[%c0_9, %c0_10, %c8, %c0_11] : memref<1x16x24x32xf32, #tpu.memory_space<vmem>>, vector<1x16x16x32xf32>
    tpu.vector_store %arg4[%c0_9, %c0_10, %c8, %c0_11], %6 {strides = array<i32>} : memref<1x16x24x32xf32, #tpu.memory_space<vmem>>, vector<1x16x16x32xf32>,
    %c0_12 = arith.constant 0 : index
    %c0_13 = arith.constant 0 : index
    %c7 = arith.constant 7 : index
    %c0_14 = arith.constant 0 : index
    %8 = tpu.strided_load %arg4[%c0_12, %c0_13, %c7, %c0_14] {strides = array<i32: 1, 1, 2, 1>} : memref<1x16x24x32xf32, #tpu.memory_space<vmem>>, vector<1x16x8x32xf32>
    %c0_15 = arith.constant 0 : index
    %c0_16 = arith.constant 0 : index
    %c8_17 = arith.constant 8 : index
    %c0_18 = arith.constant 0 : index
    %9 = tpu.strided_load %arg4[%c0_15, %c0_16, %c8_17, %c0_18] {strides = array<i32: 1, 1, 2, 1>} : memref<1x16x24x32xf32, #tpu.memory_space<vmem>>, vector<1x16x8x32xf32>
    %c0_19 = arith.constant 0 : index
    %c0_20 = arith.constant 0 : index
    %c9 = arith.constant 9 : index
    %c0_21 = arith.constant 0 : index
    %10 = tpu.strided_load %arg4[%c0_19, %c0_20, %c9, %c0_21] {strides = array<i32: 1, 1, 2, 1>} : memref<1x16x24x32xf32, #tpu.memory_space<vmem>>, vector<1x16x8x32xf32>
    %cst_22 = arith.constant 0xFF800000 : f32
    %11 = vector.broadcast %cst_22 : f32 to vector<1x1x8x32xf32>
    %c0_23 = arith.constant 0 : index
    %c0_24 = arith.constant 0 : index
    %c0_25 = arith.constant 0 : index
    %c0_26 = arith.constant 0 : index
    %12 = vector.load %arg5[%c0_23, %c0_24, %c0_25, %c0_26] : memref<1x17x8x32xf32, #tpu.memory_space<vmem>>, vector<1x1x8x32xf32>
    tpu.vector_store %arg5[%c0_23, %c0_24, %c0_25, %c0_26], %11 {strides = array<i32>} : memref<1x17x8x32xf32, #tpu.memory_space<vmem>>, vector<1x1x8x32xf32>,
    %13 = arith.maximumf %8, %9 : vector<1x16x8x32xf32>
    %14 = arith.maximumf %13, %10 : vector<1x16x8x32xf32>
    %c0_27 = arith.constant 0 : index
    %c1 = arith.constant 1 : index
    %c0_28 = arith.constant 0 : index
    %c0_29 = arith.constant 0 : index
    %15 = vector.load %arg5[%c0_27, %c1, %c0_28, %c0_29] : memref<1x17x8x32xf32, #tpu.memory_space<vmem>>, vector<1x16x8x32xf32>
    tpu.vector_store %arg5[%c0_27, %c1, %c0_28, %c0_29], %14 {strides = array<i32>} : memref<1x17x8x32xf32, #tpu.memory_space<vmem>>, vector<1x16x8x32xf32>,
    %c0_30 = arith.constant 0 : index
    %c0_31 = arith.constant 0 : index
    %c0_32 = arith.constant 0 : index
    %c0_33 = arith.constant 0 : index
    %16 = vector.load %arg5[%c0_30, %c0_31, %c0_32, %c0_33] : memref<1x17x8x32xf32, #tpu.memory_space<vmem>>, vector<1x1x8x32xf32>
    %17 = vector.shape_cast %16 : vector<1x1x8x32xf32> to vector<1x8x32xf32>
    %c0_34 = arith.constant 0 : index
    %c1_35 = arith.constant 1 : index
    %c0_36 = arith.constant 0 : index
    %c0_37 = arith.constant 0 : index
    %18 = vector.load %arg5[%c0_34, %c1_35, %c0_36, %c0_37] : memref<1x17x8x32xf32, #tpu.memory_space<vmem>>, vector<1x1x8x32xf32>
    %19 = vector.shape_cast %18 : vector<1x1x8x32xf32> to vector<1x8x32xf32>
    %c0_38 = arith.constant 0 : index
    %c2 = arith.constant 2 : index
    %c0_39 = arith.constant 0 : index
    %c0_40 = arith.constant 0 : index
    %20 = vector.load %arg5[%c0_38, %c2, %c0_39, %c0_40] : memref<1x17x8x32xf32, #tpu.memory_space<vmem>>, vector<1x1x8x32xf32>
    %21 = vector.shape_cast %20 : vector<1x1x8x32xf32> to vector<1x8x32xf32>
    %22 = arith.maximumf %17, %19 : vector<1x8x32xf32>
    %23 = arith.maximumf %22, %21 : vector<1x8x32xf32>
    %c0_41 = arith.constant 0 : index
    %c0_42 = arith.constant 0 : index
    %c0_43 = arith.constant 0 : index
    %24 = vector.load %arg3[%c0_41, %c0_42, %c0_43] : memref<1x64x32xf32, #tpu.memory_space<vmem>>, vector<1x8x32xf32>
    tpu.vector_store %arg3[%c0_41, %c0_42, %c0_43], %23 {strides = array<i32>} : memref<1x64x32xf32, #tpu.memory_space<vmem>>, vector<1x8x32xf32>,
    %c0_44 = arith.constant 0 : index
    %c2_45 = arith.constant 2 : index
    %c0_46 = arith.constant 0 : index
    %c0_47 = arith.constant 0 : index
    %25 = vector.load %arg5[%c0_44, %c2_45, %c0_46, %c0_47] : memref<1x17x8x32xf32, #tpu.memory_space<vmem>>, vector<1x1x8x32xf32>
    %26 = vector.shape_cast %25 : vector<1x1x8x32xf32> to vector<1x8x32xf32>
    %c0_48 = arith.constant 0 : index
    %c3 = arith.constant 3 : index
    %c0_49 = arith.constant 0 : index
    %c0_50 = arith.constant 0 : index
    %27 = vector.load %arg5[%c0_48, %c3, %c0_49, %c0_50] : memref<1x17x8x32xf32, #tpu.memory_space<vmem>>, vector<1x1x8x32xf32>
    %28 = vector.shape_cast %27 : vector<1x1x8x32xf32> to vector<1x8x32xf32>
    %c0_51 = arith.constant 0 : index
    %c4 = arith.constant 4 : index
    %c0_52 = arith.constant 0 : index
    %c0_53 = arith.constant 0 : index
    %29 = vector.load %arg5[%c0_51, %c4, %c0_52, %c0_53] : memref<1x17x8x32xf32, #tpu.memory_space<vmem>>, vector<1x1x8x32xf32>
    %30 = vector.shape_cast %29 : vector<1x1x8x32xf32> to vector<1x8x32xf32>
    %31 = arith.maximumf %26, %28 : vector<1x8x32xf32>
    %32 = arith.maximumf %31, %30 : vector<1x8x32xf32>
    %c0_54 = arith.constant 0 : index
    %c8_55 = arith.constant 8 : index
    %c0_56 = arith.constant 0 : index
    %33 = vector.load %arg3[%c0_54, %c8_55, %c0_56] : memref<1x64x32xf32, #tpu.memory_space<vmem>>, vector<1x8x32xf32>
    tpu.vector_store %arg3[%c0_54, %c8_55, %c0_56], %32 {strides = array<i32>} : memref<1x64x32xf32, #tpu.memory_space<vmem>>, vector<1x8x32xf32>,
    %c0_57 = arith.constant 0 : index
    %c4_58 = arith.constant 4 : index
    %c0_59 = arith.constant 0 : index
    %c0_60 = arith.constant 0 : index
    %34 = vector.load %arg5[%c0_57, %c4_58, %c0_59, %c0_60] : memref<1x17x8x32xf32, #tpu.memory_space<vmem>>, vector<1x1x8x32xf32>
    %35 = vector.shape_cast %34 : vector<1x1x8x32xf32> to vector<1x8x32xf32>
    %c0_61 = arith.constant 0 : index
    %c5 = arith.constant 5 : index
    %c0_62 = arith.constant 0 : index
    %c0_63 = arith.constant 0 : index
    %36 = vector.load %arg5[%c0_61, %c5, %c0_62, %c0_63] : memref<1x17x8x32xf32, #tpu.memory_space<vmem>>, vector<1x1x8x32xf32>
    %37 = vector.shape_cast %36 : vector<1x1x8x32xf32> to vector<1x8x32xf32>
    %c0_64 = arith.constant 0 : index
    %c6 = arith.constant 6 : index
    %c0_65 = arith.constant 0 : index
    %c0_66 = arith.constant 0 : index
    %38 = vector.load %arg5[%c0_64, %c6, %c0_65, %c0_66] : memref<1x17x8x32xf32, #tpu.memory_space<vmem>>, vector<1x1x8x32xf32>
    %39 = vector.shape_cast %38 : vector<1x1x8x32xf32> to vector<1x8x32xf32>
    %40 = arith.maximumf %35, %37 : vector<1x8x32xf32>
    %41 = arith.maximumf %40, %39 : vector<1x8x32xf32>
    %c0_67 = arith.constant 0 : index
    %c16 = arith.constant 16 : index
    %c0_68 = arith.constant 0 : index
    %42 = vector.load %arg3[%c0_67, %c16, %c0_68] : memref<1x64x32xf32, #tpu.memory_space<vmem>>, vector<1x8x32xf32>
    tpu.vector_store %arg3[%c0_67, %c16, %c0_68], %41 {strides = array<i32>} : memref<1x64x32xf32, #tpu.memory_space<vmem>>, vector<1x8x32xf32>,
    %c0_69 = arith.constant 0 : index
    %c6_70 = arith.constant 6 : index
    %c0_71 = arith.constant 0 : index
    %c0_72 = arith.constant 0 : index
    %43 = vector.load %arg5[%c0_69, %c6_70, %c0_71, %c0_72] : memref<1x17x8x32xf32, #tpu.memory_space<vmem>>, vector<1x1x8x32xf32>
    %44 = vector.shape_cast %43 : vector<1x1x8x32xf32> to vector<1x8x32xf32>
    %c0_73 = arith.constant 0 : index
    %c7_74 = arith.constant 7 : index
    %c0_75 = arith.constant 0 : index
    %c0_76 = arith.constant 0 : index
    %45 = vector.load %arg5[%c0_73, %c7_74, %c0_75, %c0_76] : memref<1x17x8x32xf32, #tpu.memory_space<vmem>>, vector<1x1x8x32xf32>
    %46 = vector.shape_cast %45 : vector<1x1x8x32xf32> to vector<1x8x32xf32>
    %c0_77 = arith.constant 0 : index
    %c8_78 = arith.constant 8 : index
    %c0_79 = arith.constant 0 : index
    %c0_80 = arith.constant 0 : index
    %47 = vector.load %arg5[%c0_77, %c8_78, %c0_79, %c0_80] : memref<1x17x8x32xf32, #tpu.memory_space<vmem>>, vector<1x1x8x32xf32>
    %48 = vector.shape_cast %47 : vector<1x1x8x32xf32> to vector<1x8x32xf32>
    %49 = arith.maximumf %44, %46 : vector<1x8x32xf32>
    %50 = arith.maximumf %49, %48 : vector<1x8x32xf32>
    %c0_81 = arith.constant 0 : index
    %c24 = arith.constant 24 : index
    %c0_82 = arith.constant 0 : index
    %51 = vector.load %arg3[%c0_81, %c24, %c0_82] : memref<1x64x32xf32, #tpu.memory_space<vmem>>, vector<1x8x32xf32>
    tpu.vector_store %arg3[%c0_81, %c24, %c0_82], %50 {strides = array<i32>} : memref<1x64x32xf32, #tpu.memory_space<vmem>>, vector<1x8x32xf32>,
    %c0_83 = arith.constant 0 : index
    %c8_84 = arith.constant 8 : index
    %c0_85 = arith.constant 0 : index
    %c0_86 = arith.constant 0 : index
    %52 = vector.load %arg5[%c0_83, %c8_84, %c0_85, %c0_86] : memref<1x17x8x32xf32, #tpu.memory_space<vmem>>, vector<1x1x8x32xf32>
    %53 = vector.shape_cast %52 : vector<1x1x8x32xf32> to vector<1x8x32xf32>
    %c0_87 = arith.constant 0 : index
    %c9_88 = arith.constant 9 : index
    %c0_89 = arith.constant 0 : index
    %c0_90 = arith.constant 0 : index
    %54 = vector.load %arg5[%c0_87, %c9_88, %c0_89, %c0_90] : memref<1x17x8x32xf32, #tpu.memory_space<vmem>>, vector<1x1x8x32xf32>
    %55 = vector.shape_cast %54 : vector<1x1x8x32xf32> to vector<1x8x32xf32>
    %c0_91 = arith.constant 0 : index
    %c10 = arith.constant 10 : index
    %c0_92 = arith.constant 0 : index
    %c0_93 = arith.constant 0 : index
    %56 = vector.load %arg5[%c0_91, %c10, %c0_92, %c0_93] : memref<1x17x8x32xf32, #tpu.memory_space<vmem>>, vector<1x1x8x32xf32>
    %57 = vector.shape_cast %56 : vector<1x1x8x32xf32> to vector<1x8x32xf32>
    %58 = arith.maximumf %53, %55 : vector<1x8x32xf32>
    %59 = arith.maximumf %58, %57 : vector<1x8x32xf32>
    %c0_94 = arith.constant 0 : index
    %c32 = arith.constant 32 : index
    %c0_95 = arith.constant 0 : index
    %60 = vector.load %arg3[%c0_94, %c32, %c0_95] : memref<1x64x32xf32, #tpu.memory_space<vmem>>, vector<1x8x32xf32>
    tpu.vector_store %arg3[%c0_94, %c32, %c0_95], %59 {strides = array<i32>} : memref<1x64x32xf32, #tpu.memory_space<vmem>>, vector<1x8x32xf32>,
    %c0_96 = arith.constant 0 : index
    %c10_97 = arith.constant 10 : index
    %c0_98 = arith.constant 0 : index
    %c0_99 = arith.constant 0 : index
    %61 = vector.load %arg5[%c0_96, %c10_97, %c0_98, %c0_99] : memref<1x17x8x32xf32, #tpu.memory_space<vmem>>, vector<1x1x8x32xf32>
    %62 = vector.shape_cast %61 : vector<1x1x8x32xf32> to vector<1x8x32xf32>
    %c0_100 = arith.constant 0 : index
    %c11 = arith.constant 11 : index
    %c0_101 = arith.constant 0 : index
    %c0_102 = arith.constant 0 : index
    %63 = vector.load %arg5[%c0_100, %c11, %c0_101, %c0_102] : memref<1x17x8x32xf32, #tpu.memory_space<vmem>>, vector<1x1x8x32xf32>
    %64 = vector.shape_cast %63 : vector<1x1x8x32xf32> to vector<1x8x32xf32>
    %c0_103 = arith.constant 0 : index
    %c12 = arith.constant 12 : index
    %c0_104 = arith.constant 0 : index
    %c0_105 = arith.constant 0 : index
    %65 = vector.load %arg5[%c0_103, %c12, %c0_104, %c0_105] : memref<1x17x8x32xf32, #tpu.memory_space<vmem>>, vector<1x1x8x32xf32>
    %66 = vector.shape_cast %65 : vector<1x1x8x32xf32> to vector<1x8x32xf32>
    %67 = arith.maximumf %62, %64 : vector<1x8x32xf32>
    %68 = arith.maximumf %67, %66 : vector<1x8x32xf32>
    %c0_106 = arith.constant 0 : index
    %c40 = arith.constant 40 : index
    %c0_107 = arith.constant 0 : index
    %69 = vector.load %arg3[%c0_106, %c40, %c0_107] : memref<1x64x32xf32, #tpu.memory_space<vmem>>, vector<1x8x32xf32>
    tpu.vector_store %arg3[%c0_106, %c40, %c0_107], %68 {strides = array<i32>} : memref<1x64x32xf32, #tpu.memory_space<vmem>>, vector<1x8x32xf32>,
    %c0_108 = arith.constant 0 : index
    %c12_109 = arith.constant 12 : index
    %c0_110 = arith.constant 0 : index
    %c0_111 = arith.constant 0 : index
    %70 = vector.load %arg5[%c0_108, %c12_109, %c0_110, %c0_111] : memref<1x17x8x32xf32, #tpu.memory_space<vmem>>, vector<1x1x8x32xf32>
    %71 = vector.shape_cast %70 : vector<1x1x8x32xf32> to vector<1x8x32xf32>
    %c0_112 = arith.constant 0 : index
    %c13 = arith.constant 13 : index
    %c0_113 = arith.constant 0 : index
    %c0_114 = arith.constant 0 : index
    %72 = vector.load %arg5[%c0_112, %c13, %c0_113, %c0_114] : memref<1x17x8x32xf32, #tpu.memory_space<vmem>>, vector<1x1x8x32xf32>
    %73 = vector.shape_cast %72 : vector<1x1x8x32xf32> to vector<1x8x32xf32>
    %c0_115 = arith.constant 0 : index
    %c14 = arith.constant 14 : index
    %c0_116 = arith.constant 0 : index
    %c0_117 = arith.constant 0 : index
    %74 = vector.load %arg5[%c0_115, %c14, %c0_116, %c0_117] : memref<1x17x8x32xf32, #tpu.memory_space<vmem>>, vector<1x1x8x32xf32>
    %75 = vector.shape_cast %74 : vector<1x1x8x32xf32> to vector<1x8x32xf32>
    %76 = arith.maximumf %71, %73 : vector<1x8x32xf32>
    %77 = arith.maximumf %76, %75 : vector<1x8x32xf32>
    %c0_118 = arith.constant 0 : index
    %c48 = arith.constant 48 : index
    %c0_119 = arith.constant 0 : index
    %78 = vector.load %arg3[%c0_118, %c48, %c0_119] : memref<1x64x32xf32, #tpu.memory_space<vmem>>, vector<1x8x32xf32>
    tpu.vector_store %arg3[%c0_118, %c48, %c0_119], %77 {strides = array<i32>} : memref<1x64x32xf32, #tpu.memory_space<vmem>>, vector<1x8x32xf32>,
    %c0_120 = arith.constant 0 : index
    %c14_121 = arith.constant 14 : index
    %c0_122 = arith.constant 0 : index
    %c0_123 = arith.constant 0 : index
    %79 = vector.load %arg5[%c0_120, %c14_121, %c0_122, %c0_123] : memref<1x17x8x32xf32, #tpu.memory_space<vmem>>, vector<1x1x8x32xf32>
    %80 = vector.shape_cast %79 : vector<1x1x8x32xf32> to vector<1x8x32xf32>
    %c0_124 = arith.constant 0 : index
    %c15 = arith.constant 15 : index
    %c0_125 = arith.constant 0 : index
    %c0_126 = arith.constant 0 : index
    %81 = vector.load %arg5[%c0_124, %c15, %c0_125, %c0_126] : memref<1x17x8x32xf32, #tpu.memory_space<vmem>>, vector<1x1x8x32xf32>
    %82 = vector.shape_cast %81 : vector<1x1x8x32xf32> to vector<1x8x32xf32>
    %c0_127 = arith.constant 0 : index
    %c16_128 = arith.constant 16 : index
    %c0_129 = arith.constant 0 : index
    %c0_130 = arith.constant 0 : index
    %83 = vector.load %arg5[%c0_127, %c16_128, %c0_129, %c0_130] : memref<1x17x8x32xf32, #tpu.memory_space<vmem>>, vector<1x1x8x32xf32>
    %84 = vector.shape_cast %83 : vector<1x1x8x32xf32> to vector<1x8x32xf32>
    %85 = arith.maximumf %80, %82 : vector<1x8x32xf32>
    %86 = arith.maximumf %85, %84 : vector<1x8x32xf32>
    %c0_131 = arith.constant 0 : index
    %c56 = arith.constant 56 : index
    %c0_132 = arith.constant 0 : index
    %87 = vector.load %arg3[%c0_131, %c56, %c0_132] : memref<1x64x32xf32, #tpu.memory_space<vmem>>, vector<1x8x32xf32>
    tpu.vector_store %arg3[%c0_131, %c56, %c0_132], %86 {strides = array<i32>} : memref<1x64x32xf32, #tpu.memory_space<vmem>>, vector<1x8x32xf32>,
    return
  }
  func.func @transform_0(%arg0: i32) -> (i32, i32, i32) {
    %c0_i32 = arith.constant 0 : i32
    %c0_i32_0 = arith.constant 0 : i32
    %c0_i32_1 = arith.constant 0 : i32
    return %arg0, %c0_i32, %c0_i32_0 : i32, i32, i32
  }
  func.func @transform_1(%arg0: i32) -> (i32, i32) {
    %c0_i32 = arith.constant 0 : i32
    %c0_i32_0 = arith.constant 0 : i32
    %c0_i32_1 = arith.constant 0 : i32
    return %c0_i32, %c0_i32_0 : i32, i32
  }
  func.func @transform_2(%arg0: i32) -> (i32, i32, i32) {
    %c0_i32 = arith.constant 0 : i32
    %c0_i32_0 = arith.constant 0 : i32
    %c0_i32_1 = arith.constant 0 : i32
    return %arg0, %c0_i32, %c0_i32_0 : i32, i32, i32
  }
}

</mosaic_0001>

<llo_original>
// kernel: tpu_custom_call.1
$region0: #{tpu_custom_call.1}
  #allocation0 [shape = 'u32[]', space=smem, size = 0x4, offset = 0x4, fixed_abs, tag = 'smem constant byte address 0x4 - core index']
  #allocation1 [shape = 'u32[144,128]{1,0:T(1,128)}', space=vmem, size = 0x12000, scoped, tag = 'internal scratch']
  #allocation2 [shape = 'f32[1,16,24,32]{3,2,1,0:T(8,128)}', space=vmem, size = 0x30000, scoped, tag = 'scratch operand']
  #allocation3 [shape = 'f32[1,17,8,32]{3,2,1,0:T(8,128)}', space=vmem, size = 0x11000, scoped, tag = 'scratch operand']
  %s0 = inlined_call_operand.hbm [shape: bf16[2,256,128], index: 0, kind: input, shape index: {}]
  %s1 = inlined_call_operand.vmem [shape: bf16[128,32], index: 1, kind: input, shape index: {}]
  %s2 = inlined_call_operand.vmem [shape: f32[2,64,32], index: 2, kind: output, shape index: {}]
  %s3 = sld [smem:[#allocation0]]
  $region45: #{tpu_custom_call.1} parent=0
    _
  %s5 = ssub.s32 1, %s3
  %s6 = scalar_select 0, %s5, %s3
  $region1: #{tpu_custom_call.1} parent=0
    #allocation4 [shape = 'u8[131072]{0}', space=vmem, size = 0x20000, scoped, tag = 'input window, operand 0']
    #allocation5 [shape = 's32[2]{0}', space=sflag, size = 0x8, scoped, tag = 'scoped memory for tpu_custom_call.1']
    %7 = vsyncpa [#allocation5], 0
    %s8 = scalar_lea.sflag [#allocation5], 1
    %9 = vsyncpa %s8, 0
    loop: start=0, step=1, limit=4
    $region2: #{tpu_custom_call.1} parent=1 // loop_pre_header
      _
    $region3: #{tpu_custom_call.1} parent=1 // loop_header
      %s11 = sphi 0, %s15
      %p12 = scmp.ge.s32.totalorder %s11, 4
      %s21 = sphi 0, %s23
      %s24 = sphi 0, %s21
      %s25 = sphi 0, %s24
      %s41 = sphi 0, %s25
      %s45 = sphi 0, %s45
      %s47 = sphi 0, %s45
      %s48 = sphi 0, %s47
      %s62 = sphi 0, %s48
      %s68 = sphi 0, %s70
      %s71 = sphi 0, %s68
      %s72 = sphi 0, %s71
      %s88 = sphi 0, %s72
    $region4: #{tpu_custom_call.1} parent=1 // loop_header_branch
      %14 = sbr.rel (%p12) target = $region8
    $region5: #{tpu_custom_call.1} parent=1 // loop_body
      %s16 = ssub.s32 %s11, 1
      %s17 = ssub.s32 %s11, 2
      %s18 = sadd.s32 %s11, 1
      %s19 = ssub.s32 %s11, %s18
      %p20 = scmp.eq.s32.totalorder %s19, 0
      %s22 = sadd.s32 %s21, 1
      %s23 = scalar_select %p20, %s21, %s22
      %p26 = pneg %p20
      %p27 = scmp.eq.s32.totalorder %s11, 1
      %p28 = por %p26, %p27
      %p29 = scmp.ne.s32.totalorder %s21, %s24
      %p30 = scmp.eq.s32.totalorder %s11, 0
      %p31 = por %p29, %p30
      %p32 = scmp.ne.s32.totalorder %s21, %s24
      %p33 = scmp.eq.s32.totalorder %s16, 1
      %p34 = por %p32, %p33
      %p35 = scmp.ne.s32.totalorder %s24, %s25
      %p36 = scmp.eq.s32.totalorder %s16, 0
      %p37 = por %p35, %p36
      %p38 = scmp.ne.s32.totalorder %s24, %s25
      %p39 = scmp.eq.s32.totalorder %s17, 1
      %p40 = por %p38, %p39
      %p42 = scmp.ne.s32.totalorder %s25, %s41
      %p43 = scmp.eq.s32.totalorder %s17, 0
      %p44 = por %p42, %p43
      %s46 = sadd.s32 %s45, 1
      %p49 = scmp.eq.s32.totalorder %s11, 1
      %p50 = scmp.ne.s32.totalorder %s45, %s47
      %p51 = scmp.eq.s32.totalorder %s11, 0
      %p52 = por %p50, %p51
      %p53 = scmp.ne.s32.totalorder %s45, %s47
      %p54 = scmp.eq.s32.totalorder %s16, 1
      %p55 = por %p53, %p54
      %p56 = scmp.ne.s32.totalorder %s47, %s48
      %p57 = scmp.eq.s32.totalorder %s16, 0
      %p58 = por %p56, %p57
      %p59 = scmp.ne.s32.totalorder %s47, %s48
      %p60 = scmp.eq.s32.totalorder %s17, 1
      %p61 = por %p59, %p60
      %p63 = scmp.ne.s32.totalorder %s48, %s62
      %p64 = scmp.eq.s32.totalorder %s17, 0
      %p65 = por %p63, %p64
      %s66 = ssub.s32 %s11, %s18
      %p67 = scmp.eq.s32.totalorder %s66, 0
      %s69 = sadd.s32 %s68, 1
      %s70 = scalar_select %p67, %s68, %s69
      %p73 = pneg %p67
      %p74 = scmp.eq.s32.totalorder %s11, 1
      %p75 = por %p73, %p74
      %p76 = scmp.ne.s32.totalorder %s68, %s71
      %p77 = scmp.eq.s32.totalorder %s11, 0
      %p78 = por %p76, %p77
      %p79 = scmp.ne.s32.totalorder %s68, %s71
      %p80 = scmp.eq.s32.totalorder %s16, 1
      %p81 = por %p79, %p80
      %p82 = scmp.ne.s32.totalorder %s71, %s72
      %p83 = scmp.eq.s32.totalorder %s16, 0
      %p84 = por %p82, %p83
      %p85 = scmp.ne.s32.totalorder %s71, %s72
      %p86 = scmp.eq.s32.totalorder %s17, 1
      %p87 = por %p85, %p86
      %p89 = scmp.ne.s32.totalorder %s72, %s88
      %p90 = scmp.eq.s32.totalorder %s17, 0
      %p91 = por %p89, %p90
      %p92 = scmp.le.s32.totalorder 1, %s11
      %p93 = scmp.lt.s32.totalorder %s11, 3
      %p94 = pnand %p92, %p93
      %p95 = pneg %p94
      // Predicated region
      $region9: #{tpu_custom_call.1} parent=5 // pred_check
        _
      $region10: #{tpu_custom_call.1} parent=5 // pred_check_branch
        %97 = sbr.rel (%p94) target = $region12
      $region11: #{tpu_custom_call.1} parent=5 // pred_region
        %s98 = ssub.s32 %s11, 1
        // Predicated region
        $region13: #{tpu_custom_call.1} parent=11 // pred_check
          %p99 = pneg %p58
        $region14: #{tpu_custom_call.1} parent=11 // pred_check_branch
          %101 = sbr.rel (%p99) target = $region16
        $region15: #{tpu_custom_call.1} parent=11 // pred_region
          _
        $region16: #{tpu_custom_call.1} parent=11 // pred_fallthru
          _
      $region12: #{tpu_custom_call.1} parent=5 // pred_fallthru
        _
      %p102 = scmp.lt.s32.totalorder %s11, 2
      // Predicated region
      $region17: #{tpu_custom_call.1} parent=5 // pred_check
        %p103 = pneg %p102
      $region18: #{tpu_custom_call.1} parent=5 // pred_check_branch
        %105 = sbr.rel (%p103) target = $region20
      $region19: #{tpu_custom_call.1} parent=5 // pred_region
        // Predicated region
        $region21: #{tpu_custom_call.1} parent=19 // pred_check
          %p106 = pneg %p31
        $region22: #{tpu_custom_call.1} parent=19 // pred_check_branch
          %108 = sbr.rel (%p106) target = $region24
        $region23: #{tpu_custom_call.1} parent=19 // pred_region
          %s109 = sand.u32 %s21, 1
          %s110 = scalar_lea.sflag [#allocation5], %s109
          %s111 = sand.u32 %s21, 1
          %s112 = smul.addr %s111, 128
          %s113 = scalar_lea.vmem [#allocation4], %s112
          %s115 = ssub.s32 2048, 2048
          %116 = vsyncadd %s110, %s115
          %s117 = smul.addr %s11, 32
          %s118 = smul.addr %s117, 64
          %s119 = scalar_lea.hbm %s0, %s118
          %s120 = sshll.u32 %s113, 4
          %s121 = int_to_ptr.vmem [resolvable:$true] %s120
          %126 = dma.hbm_to_vmem [thread:$0]  %s119, 2048, %s121, %s110, 64, 64, 4
        $region24: #{tpu_custom_call.1} parent=19 // pred_fallthru
          _
      $region20: #{tpu_custom_call.1} parent=5 // pred_fallthru
        _
      %p127 = scmp.le.s32.totalorder 1, %s11
      %p128 = scmp.lt.s32.totalorder %s11, 3
      %p129 = pnand %p127, %p128
      %p130 = pneg %p129
      // Predicated region
      $region25: #{tpu_custom_call.1} parent=5 // pred_check
        _
      $region26: #{tpu_custom_call.1} parent=5 // pred_check_branch
        %132 = sbr.rel (%p129) target = $region28
      $region27: #{tpu_custom_call.1} parent=5 // pred_region
        %s133 = ssub.s32 %s11, 1
        %s134 = sand.u32 %s24, 1
        %s135 = scalar_lea.sflag [#allocation5], %s134
        %s136 = sand.u32 %s24, 1
        %s137 = smul.addr %s136, 128
        %s138 = scalar_lea.vmem [#allocation4], %s137
        // Predicated region
        $region29: #{tpu_custom_call.1} parent=27 // pred_check
          %p139 = pneg %p37
        $region30: #{tpu_custom_call.1} parent=27 // pred_check_branch
          %141 = sbr.rel (%p139) target = $region32
        $region31: #{tpu_custom_call.1} parent=27 // pred_region
          %142 = dma.done %s135, 2048
        $region32: #{tpu_custom_call.1} parent=27 // pred_fallthru
          _
        %s143 = sand.u32 %s24, 1
        %s144 = scalar_lea.sflag [#allocation5], %s143
        %s145 = sand.u32 %s24, 1
        %s146 = smul.addr %s145, 128
        %s147 = scalar_lea.vmem [#allocation4], %s146
        %p148 = pneg %p37
        %p149 = pneg %p34
        %p150 = pneg %p58
        %p151 = pneg %p55
        %p152 = pneg %p84
        %p153 = pneg %p81
        %p154 = scmp.lt.s32.totalorder %s16, 1
        %s155 = scalar_select %p154, %s16, 1
        %s156 = smul.addr %s155, 8
        %s157 = smul.addr %s156, 8
        %s158 = scalar_lea.vmem %s2, %s157
        %p159 = scmp.lt.s32.totalorder %s16, 1
        %s160 = scalar_select %p159, %s16, 1
        %s161 = smul.addr %s160, 8
        %s162 = smul.addr %s161, 8
        %s163 = scalar_lea.vmem %s2, %s162
        %v165 = vld [vmem:[%s138] sm:$0xf]
        %v166 = vld [vmem:[%s138 + $0x4] sm:$0xf]
        %v167 = vld [vmem:[%s138 + $0x8] sm:$0xf]
        %v168 = vld [vmem:[%s138 + $0xc] sm:$0xf]
        %v169 = vld [vmem:[%s138 + $0x10] sm:$0xf]
        %v170 = vld [vmem:[%s138 + $0x14] sm:$0xf]
        %v171 = vld [vmem:[%s138 + $0x18] sm:$0xf]
        %v172 = vld [vmem:[%s138 + $0x1c] sm:$0xf]
        %v173 = vld [vmem:[%s138 + $0x20] sm:$0xf]
        %v174 = vld [vmem:[%s138 + $0x24] sm:$0xf]
        %v175 = vld [vmem:[%s138 + $0x28] sm:$0xf]
        %v176 = vld [vmem:[%s138 + $0x2c] sm:$0xf]
        %v177 = vld [vmem:[%s138 + $0x30] sm:$0xf]
        %v178 = vld [vmem:[%s138 + $0x34] sm:$0xf]
        %v179 = vld [vmem:[%s138 + $0x38] sm:$0xf]
        %v180 = vld [vmem:[%s138 + $0x3c] sm:$0xf]
        %v181 = vld [vmem:[%s138 + $0x40] sm:$0xf]
        %v182 = vld [vmem:[%s138 + $0x44] sm:$0xf]
        %v183 = vld [vmem:[%s138 + $0x48] sm:$0xf]
        %v184 = vld [vmem:[%s138 + $0x4c] sm:$0xf]
        %v185 = vld [vmem:[%s138 + $0x50] sm:$0xf]
        %v186 = vld [vmem:[%s138 + $0x54] sm:$0xf]
        %v187 = vld [vmem:[%s138 + $0x58] sm:$0xf]
        %v188 = vld [vmem:[%s138 + $0x5c] sm:$0xf]
        %v189 = vld [vmem:[%s138 + $0x60] sm:$0xf]
        %v190 = vld [vmem:[%s138 + $0x64] sm:$0xf]
        %v191 = vld [vmem:[%s138 + $0x68] sm:$0xf]
        %v192 = vld [vmem:[%s138 + $0x6c] sm:$0xf]
        %v193 = vld [vmem:[%s138 + $0x70] sm:$0xf]
        %v194 = vld [vmem:[%s138 + $0x74] sm:$0xf]
        %v195 = vld [vmem:[%s138 + $0x78] sm:$0xf]
        %v196 = vld [vmem:[%s138 + $0x7c] sm:$0xf]
        %v197 = vld [vmem:[%s1] sm:$0xf]
        %v198 = vld [vmem:[%s1 + $0x4] sm:$0xf]
        %v199 = vld [vmem:[%s1 + $0x8] sm:$0xf]
        %v200 = vld [vmem:[%s1 + $0xc] sm:$0xf]
        %v201 = vld [vmem:[%s1 + $0x10] sm:$0xf]
        %v202 = vld [vmem:[%s1 + $0x14] sm:$0xf]
        %v203 = vld [vmem:[%s1 + $0x18] sm:$0xf]
        %v204 = vld [vmem:[%s1 + $0x1c] sm:$0xf]
        %v205 = vld [vmem:[%s1 + $0x20] sm:$0xf]
        %v206 = vld [vmem:[%s1 + $0x24] sm:$0xf]
        %v207 = vld [vmem:[%s1 + $0x28] sm:$0xf]
        %v208 = vld [vmem:[%s1 + $0x2c] sm:$0xf]
        %v209 = vld [vmem:[%s1 + $0x30] sm:$0xf]
        %v210 = vld [vmem:[%s1 + $0x34] sm:$0xf]
        %v211 = vld [vmem:[%s1 + $0x38] sm:$0xf]
        %v212 = vld [vmem:[%s1 + $0x3c] sm:$0xf]
        %v245 = vunpack.c.l.b16 %v165
        %v246 = vunpack.c.l.b16 %v166
        %v247 = vunpack.c.l.b16 %v167
        %v248 = vunpack.c.l.b16 %v168
        %v249 = vunpack.c.l.b16 %v169
        %v250 = vunpack.c.l.b16 %v170
        %v251 = vunpack.c.l.b16 %v171
        %v252 = vunpack.c.l.b16 %v172
        %v253 = vunpack.c.l.b16 %v173
        %v254 = vunpack.c.l.b16 %v174
        %v255 = vunpack.c.l.b16 %v175
        %v256 = vunpack.c.l.b16 %v176
        %v257 = vunpack.c.l.b16 %v177
        %v258 = vunpack.c.l.b16 %v178
        %v259 = vunpack.c.l.b16 %v179
        %v260 = vunpack.c.l.b16 %v180
        %v261 = vunpack.c.l.b16 %v181
        %v262 = vunpack.c.l.b16 %v182
        %v263 = vunpack.c.l.b16 %v183
        %v264 = vunpack.c.l.b16 %v184
        %v265 = vunpack.c.l.b16 %v185
        %v266 = vunpack.c.l.b16 %v186
        %v267 = vunpack.c.l.b16 %v187
        %v268 = vunpack.c.l.b16 %v188
        %v269 = vunpack.c.l.b16 %v189
        %v270 = vunpack.c.l.b16 %v190
        %v271 = vunpack.c.l.b16 %v191
        %v272 = vunpack.c.l.b16 %v192
        %v273 = vunpack.c.l.b16 %v193
        %v274 = vunpack.c.l.b16 %v194
        %v275 = vunpack.c.l.b16 %v195
        %v276 = vunpack.c.l.b16 %v196
        %v277 = vpack.c.b16 %v246, %v245
        %v278 = vpack.c.b16 %v248, %v247
        %v279 = vpack.c.b16 %v250, %v249
        %v280 = vpack.c.b16 %v252, %v251
        %v281 = vpack.c.b16 %v254, %v253
        %v282 = vpack.c.b16 %v256, %v255
        %v283 = vpack.c.b16 %v258, %v257
        %v284 = vpack.c.b16 %v260, %v259
        %v285 = vpack.c.b16 %v262, %v261
        %v286 = vpack.c.b16 %v264, %v263
        %v287 = vpack.c.b16 %v266, %v265
        %v288 = vpack.c.b16 %v268, %v267
        %v289 = vpack.c.b16 %v270, %v269
        %v290 = vpack.c.b16 %v272, %v271
        %v291 = vpack.c.b16 %v274, %v273
        %v292 = vpack.c.b16 %v276, %v275
        %v325 = vunpack.c.l.b16 %v197
        %v326 = vunpack.c.l.b16 %v198
        %v327 = vunpack.c.l.b16 %v199
        %v328 = vunpack.c.l.b16 %v200
        %v329 = vunpack.c.l.b16 %v201
        %v330 = vunpack.c.l.b16 %v202
        %v331 = vunpack.c.l.b16 %v203
        %v332 = vunpack.c.l.b16 %v204
        %v333 = vunpack.c.l.b16 %v205
        %v334 = vunpack.c.l.b16 %v206
        %v335 = vunpack.c.l.b16 %v207
        %v336 = vunpack.c.l.b16 %v208
        %v337 = vunpack.c.l.b16 %v209
        %v338 = vunpack.c.l.b16 %v210
        %v339 = vunpack.c.l.b16 %v211
        %v340 = vunpack.c.l.b16 %v212
        %v341 = vpack.c.b16 %v326, %v325
        %v342 = vpack.c.b16 %v328, %v327
        %v343 = vpack.c.b16 %v330, %v329
        %v344 = vpack.c.b16 %v332, %v331
        %v345 = vpack.c.b16 %v334, %v333
        %v346 = vpack.c.b16 %v336, %v335
        %v347 = vpack.c.b16 %v338, %v337
        %v348 = vpack.c.b16 %v340, %v339
        %357 = vmatprep.subr.bf16.mxu0 0
        %358 = vmatpush1.bf16.msra.mxu0 %v341
        %359 = vmatprep.subr.bf16.mxu0 0
        %360 = vmatpush1.bf16.msra.mxu0 %v342
        %361 = vmatprep.subr.bf16.mxu0 0
        %362 = vmatpush1.bf16.msra.mxu0 %v343
        %363 = vmatprep.subr.bf16.mxu0 0
        %364 = vmatpush1.bf16.msra.mxu0 %v344
        %365 = vmatprep.subr.bf16.mxu0 0
        %366 = vmatpush1.bf16.msra.mxu0 %v345
        %367 = vmatprep.subr.bf16.mxu0 0
        %368 = vmatpush1.bf16.msra.mxu0 %v346
        %369 = vmatprep.subr.bf16.mxu0 0
        %370 = vmatpush1.bf16.msra.mxu0 %v347
        %371 = vmatprep.subr.bf16.mxu0 0
        %372 = vmatpush1.bf16.msra.mxu0 %v348
        %373 = vmatprep.subr.bf16.mxu0 0
        %374 = vmatpush1.bf16.msra.mxu0 0
        %375 = vmatprep.subr.bf16.mxu0 0
        %376 = vmatpush1.bf16.msra.mxu0 0
        %377 = vmatprep.subr.bf16.mxu0 0
        %378 = vmatpush1.bf16.msra.mxu0 0
        %379 = vmatprep.subr.bf16.mxu0 0
        %380 = vmatpush1.bf16.msra.mxu0 0
        %381 = vmatprep.subr.bf16.mxu0 0
        %382 = vmatpush1.bf16.msra.mxu0 0
        %383 = vmatprep.subr.bf16.mxu0 0
        %384 = vmatpush1.bf16.msra.mxu0 0
        %385 = vmatprep.subr.bf16.mxu0 0
        %386 = vmatpush1.bf16.msra.mxu0 0
        %387 = vmatprep.subr.bf16.mxu0 0
        %388 = vmatpush1.bf16.msra.mxu0 0
        %389 = vmatprep.mubr.bf16.mxu0 0
        %390 = vmatmul.mubr.bf16.gmra.mrb[0].mxu0 %v277
        %v391 = vpop.f32.mrb[0].mxu0
        %v392 = vadd.f32 0.0, %v391
        %v393 = vpop.f32.mrb[0].mxu0
        %v394 = vpop.f32.mrb[0].mxu0
        %v395 = vadd.f32 0.0, %v394
        %v396 = vpop.f32.mrb[0].mxu0
        %397 = vmatprep.mubr.bf16.mxu0 0
        %398 = vmatmul.mubr.bf16.gmra.mrb[0].mxu0 %v278
        %v399 = vpop.f32.mrb[0].mxu0
        %v400 = vadd.f32 0.0, %v399
        %v401 = vpop.f32.mrb[0].mxu0
        %v402 = vpop.f32.mrb[0].mxu0
        %v403 = vadd.f32 0.0, %v402
        %v404 = vpop.f32.mrb[0].mxu0
        %405 = vmatprep.mubr.bf16.mxu0 0
        %406 = vmatmul.mubr.bf16.gmra.mrb[0].mxu0 %v279
        %v407 = vpop.f32.mrb[0].mxu0
        %v408 = vadd.f32 0.0, %v407
        %v409 = vpop.f32.mrb[0].mxu0
        %v410 = vpop.f32.mrb[0].mxu0
        %v411 = vadd.f32 0.0, %v410
        %v412 = vpop.f32.mrb[0].mxu0
        %413 = vmatprep.mubr.bf16.mxu0 0
        %414 = vmatmul.mubr.bf16.gmra.mrb[0].mxu0 %v280
        %v415 = vpop.f32.mrb[0].mxu0
        %v416 = vadd.f32 0.0, %v415
        %v417 = vpop.f32.mrb[0].mxu0
        %v418 = vpop.f32.mrb[0].mxu0
        %v419 = vadd.f32 0.0, %v418
        %v420 = vpop.f32.mrb[0].mxu0
        %421 = vmatprep.mubr.bf16.mxu0 0
        %422 = vmatmul.mubr.bf16.gmra.mrb[0].mxu0 %v281
        %v423 = vpop.f32.mrb[0].mxu0
        %v424 = vadd.f32 0.0, %v423
        %v425 = vpop.f32.mrb[0].mxu0
        %v426 = vpop.f32.mrb[0].mxu0
        %v427 = vadd.f32 0.0, %v426
        %v428 = vpop.f32.mrb[0].mxu0
        %429 = vmatprep.mubr.bf16.mxu0 0
        %430 = vmatmul.mubr.bf16.gmra.mrb[0].mxu0 %v282
        %v431 = vpop.f32.mrb[0].mxu0
        %v432 = vadd.f32 0.0, %v431
        %v433 = vpop.f32.mrb[0].mxu0
        %v434 = vpop.f32.mrb[0].mxu0
        %v435 = vadd.f32 0.0, %v434
        %v436 = vpop.f32.mrb[0].mxu0
        %437 = vmatprep.mubr.bf16.mxu0 0
        %438 = vmatmul.mubr.bf16.gmra.mrb[0].mxu0 %v283
        %v439 = vpop.f32.mrb[0].mxu0
        %v440 = vadd.f32 0.0, %v439
        %v441 = vpop.f32.mrb[0].mxu0
        %v442 = vpop.f32.mrb[0].mxu0
        %v443 = vadd.f32 0.0, %v442
        %v444 = vpop.f32.mrb[0].mxu0
        %445 = vmatprep.mubr.bf16.mxu0 0
        %446 = vmatmul.mubr.bf16.gmra.mrb[0].mxu0 %v284
        %v447 = vpop.f32.mrb[0].mxu0
        %v448 = vadd.f32 0.0, %v447
        %v449 = vpop.f32.mrb[0].mxu0
        %v450 = vpop.f32.mrb[0].mxu0
        %v451 = vadd.f32 0.0, %v450
        %v452 = vpop.f32.mrb[0].mxu0
        %453 = vmatprep.mubr.bf16.mxu0 0
        %454 = vmatmul.mubr.bf16.gmra.mrb[0].mxu0 %v285
        %v455 = vpop.f32.mrb[0].mxu0
        %v456 = vadd.f32 0.0, %v455
        %v457 = vpop.f32.mrb[0].mxu0
        %v458 = vpop.f32.mrb[0].mxu0
        %v459 = vadd.f32 0.0, %v458
        %v460 = vpop.f32.mrb[0].mxu0
        %461 = vmatprep.mubr.bf16.mxu0 0
        %462 = vmatmul.mubr.bf16.gmra.mrb[0].mxu0 %v286
        %v463 = vpop.f32.mrb[0].mxu0
        %v464 = vadd.f32 0.0, %v463
        %v465 = vpop.f32.mrb[0].mxu0
        %v466 = vpop.f32.mrb[0].mxu0
        %v467 = vadd.f32 0.0, %v466
        %v468 = vpop.f32.mrb[0].mxu0
        %469 = vmatprep.mubr.bf16.mxu0 0
        %470 = vmatmul.mubr.bf16.gmra.mrb[0].mxu0 %v287
        %v471 = vpop.f32.mrb[0].mxu0
        %v472 = vadd.f32 0.0, %v471
        %v473 = vpop.f32.mrb[0].mxu0
        %v474 = vpop.f32.mrb[0].mxu0
        %v475 = vadd.f32 0.0, %v474
        %v476 = vpop.f32.mrb[0].mxu0
        %477 = vmatprep.mubr.bf16.mxu0 0
        %478 = vmatmul.mubr.bf16.gmra.mrb[0].mxu0 %v288
        %v479 = vpop.f32.mrb[0].mxu0
        %v480 = vadd.f32 0.0, %v479
        %v481 = vpop.f32.mrb[0].mxu0
        %v482 = vpop.f32.mrb[0].mxu0
        %v483 = vadd.f32 0.0, %v482
        %v484 = vpop.f32.mrb[0].mxu0
        %485 = vmatprep.mubr.bf16.mxu0 0
        %486 = vmatmul.mubr.bf16.gmra.mrb[0].mxu0 %v289
        %v487 = vpop.f32.mrb[0].mxu0
        %v488 = vadd.f32 0.0, %v487
        %v489 = vpop.f32.mrb[0].mxu0
        %v490 = vpop.f32.mrb[0].mxu0
        %v491 = vadd.f32 0.0, %v490
        %v492 = vpop.f32.mrb[0].mxu0
        %493 = vmatprep.mubr.bf16.mxu0 0
        %494 = vmatmul.mubr.bf16.gmra.mrb[0].mxu0 %v290
        %v495 = vpop.f32.mrb[0].mxu0
        %v496 = vadd.f32 0.0, %v495
        %v497 = vpop.f32.mrb[0].mxu0
        %v498 = vpop.f32.mrb[0].mxu0
        %v499 = vadd.f32 0.0, %v498
        %v500 = vpop.f32.mrb[0].mxu0
        %501 = vmatprep.mubr.bf16.mxu0 0
        %502 = vmatmul.mubr.bf16.gmra.mrb[0].mxu0 %v291
        %v503 = vpop.f32.mrb[0].mxu0
        %v504 = vadd.f32 0.0, %v503
        %v505 = vpop.f32.mrb[0].mxu0
        %v506 = vpop.f32.mrb[0].mxu0
        %v507 = vadd.f32 0.0, %v506
        %v508 = vpop.f32.mrb[0].mxu0
        %509 = vmatprep.mubr.bf16.mxu0 0
        %510 = vmatmul.mubr.bf16.gmra.mrb[0].mxu0 %v292
        %v511 = vpop.f32.mrb[0].mxu0
        %v512 = vadd.f32 0.0, %v511
        %v513 = vpop.f32.mrb[0].mxu0
        %v514 = vpop.f32.mrb[0].mxu0
        %v515 = vadd.f32 0.0, %v514
        %v516 = vpop.f32.mrb[0].mxu0
        %517 = vdwg.mxu0
        %vm518 = vcmask 261120
        %519 = vst.msk [vmem:[#allocation2] sm:$0xff] %vm518, -inf
        %520 = vst.msk [vmem:[#allocation2 + $0x18] sm:$0xff] %vm518, -inf
        %521 = vst.msk [vmem:[#allocation2 + $0x30] sm:$0xff] %vm518, -inf
        %522 = vst.msk [vmem:[#allocation2 + $0x48] sm:$0xff] %vm518, -inf
        %523 = vst.msk [vmem:[#allocation2 + $0x60] sm:$0xff] %vm518, -inf
        %524 = vst.msk [vmem:[#allocation2 + $0x78] sm:$0xff] %vm518, -inf
        %525 = vst.msk [vmem:[#allocation2 + $0x90] sm:$0xff] %vm518, -inf
        %526 = vst.msk [vmem:[#allocation2 + $0xa8] sm:$0xff] %vm518, -inf
        %527 = vst.msk [vmem:[#allocation2 + $0xc0] sm:$0xff] %vm518, -inf
        %528 = vst.msk [vmem:[#allocation2 + $0xd8] sm:$0xff] %vm518, -inf
        %529 = vst.msk [vmem:[#allocation2 + $0xf0] sm:$0xff] %vm518, -inf
        %530 = vst.msk [vmem:[#allocation2 + $0x108] sm:$0xff] %vm518, -inf
        %531 = vst.msk [vmem:[#allocation2 + $0x120] sm:$0xff] %vm518, -inf
        %532 = vst.msk [vmem:[#allocation2 + $0x138] sm:$0xff] %vm518, -inf
        %533 = vst.msk [vmem:[#allocation2 + $0x150] sm:$0xff] %vm518, -inf
        %534 = vst.msk [vmem:[#allocation2 + $0x168] sm:$0xff] %vm518, -inf
        %535 = vst.msk [vmem:[#allocation2 + $0x8] sm:$0xff] %vm518, %v392
        %536 = vst.msk [vmem:[#allocation2 + $0x10] sm:$0xff] %vm518, %v395
        %537 = vst.msk [vmem:[#allocation2 + $0x20] sm:$0xff] %vm518, %v400
        %538 = vst.msk [vmem:[#allocation2 + $0x28] sm:$0xff] %vm518, %v403
        %539 = vst.msk [vmem:[#allocation2 + $0x38] sm:$0xff] %vm518, %v408
        %540 = vst.msk [vmem:[#allocation2 + $0x40] sm:$0xff] %vm518, %v411
        %541 = vst.msk [vmem:[#allocation2 + $0x50] sm:$0xff] %vm518, %v416
        %542 = vst.msk [vmem:[#allocation2 + $0x58] sm:$0xff] %vm518, %v419
        %543 = vst.msk [vmem:[#allocation2 + $0x68] sm:$0xff] %vm518, %v424
        %544 = vst.msk [vmem:[#allocation2 + $0x70] sm:$0xff] %vm518, %v427
        %545 = vst.msk [vmem:[#allocation2 + $0x80] sm:$0xff] %vm518, %v432
        %546 = vst.msk [vmem:[#allocation2 + $0x88] sm:$0xff] %vm518, %v435
        %547 = vst.msk [vmem:[#allocation2 + $0x98] sm:$0xff] %vm518, %v440
        %548 = vst.msk [vmem:[#allocation2 + $0xa0] sm:$0xff] %vm518, %v443
        %549 = vst.msk [vmem:[#allocation2 + $0xb0] sm:$0xff] %vm518, %v448
        %550 = vst.msk [vmem:[#allocation2 + $0xb8] sm:$0xff] %vm518, %v451
        %551 = vst.msk [vmem:[#allocation2 + $0xc8] sm:$0xff] %vm518, %v456
        %552 = vst.msk [vmem:[#allocation2 + $0xd0] sm:$0xff] %vm518, %v459
        %553 = vst.msk [vmem:[#allocation2 + $0xe0] sm:$0xff] %vm518, %v464
        %554 = vst.msk [vmem:[#allocation2 + $0xe8] sm:$0xff] %vm518, %v467
        %555 = vst.msk [vmem:[#allocation2 + $0xf8] sm:$0xff] %vm518, %v472
        %556 = vst.msk [vmem:[#allocation2 + $0x100] sm:$0xff] %vm518, %v475
        %557 = vst.msk [vmem:[#allocation2 + $0x110] sm:$0xff] %vm518, %v480
        %558 = vst.msk [vmem:[#allocation2 + $0x118] sm:$0xff] %vm518, %v483
        %559 = vst.msk [vmem:[#allocation2 + $0x128] sm:$0xff] %vm518, %v488
        %560 = vst.msk [vmem:[#allocation2 + $0x130] sm:$0xff] %vm518, %v491
        %561 = vst.msk [vmem:[#allocation2 + $0x140] sm:$0xff] %vm518, %v496
        %562 = vst.msk [vmem:[#allocation2 + $0x148] sm:$0xff] %vm518, %v499
        %563 = vst.msk [vmem:[#allocation2 + $0x158] sm:$0xff] %vm518, %v504
        %564 = vst.msk [vmem:[#allocation2 + $0x160] sm:$0xff] %vm518, %v507
        %565 = vst.msk [vmem:[#allocation2 + $0x170] sm:$0xff] %vm518, %v512
        %566 = vst.msk [vmem:[#allocation2 + $0x178] sm:$0xff] %vm518, %v515
        %s567 = scalar_lea.vmem [#allocation2], 7
        %v568 = vld [vmem:[%s567] ss:$2 sm:$0xff]
        %s569 = scalar_lea.vmem [#allocation2], 31
        %v570 = vld [vmem:[%s569] ss:$2 sm:$0xff]
        %s571 = scalar_lea.vmem [#allocation2], 55
        %v572 = vld [vmem:[%s571] ss:$2 sm:$0xff]
        %s573 = scalar_lea.vmem [#allocation2], 79
        %v574 = vld [vmem:[%s573] ss:$2 sm:$0xff]
        %s575 = scalar_lea.vmem [#allocation2], 103
        %v576 = vld [vmem:[%s575] ss:$2 sm:$0xff]
        %s577 = scalar_lea.vmem [#allocation2], 127
        %v578 = vld [vmem:[%s577] ss:$2 sm:$0xff]
        %s579 = scalar_lea.vmem [#allocation2], 151
        %v580 = vld [vmem:[%s579] ss:$2 sm:$0xff]
        %s581 = scalar_lea.vmem [#allocation2], 175
        %v582 = vld [vmem:[%s581] ss:$2 sm:$0xff]
        %s583 = scalar_lea.vmem [#allocation2], 199
        %v584 = vld [vmem:[%s583] ss:$2 sm:$0xff]
        %s585 = scalar_lea.vmem [#allocation2], 223
        %v586 = vld [vmem:[%s585] ss:$2 sm:$0xff]
        %s587 = scalar_lea.vmem [#allocation2], 247
        %v588 = vld [vmem:[%s587] ss:$2 sm:$0xff]
        %s589 = scalar_lea.vmem [#allocation2], 271
        %v590 = vld [vmem:[%s589] ss:$2 sm:$0xff]
        %s591 = scalar_lea.vmem [#allocation2], 295
        %v592 = vld [vmem:[%s591] ss:$2 sm:$0xff]
        %s593 = scalar_lea.vmem [#allocation2], 319
        %v594 = vld [vmem:[%s593] ss:$2 sm:$0xff]
        %s595 = scalar_lea.vmem [#allocation2], 343
        %v596 = vld [vmem:[%s595] ss:$2 sm:$0xff]
        %s597 = scalar_lea.vmem [#allocation2], 367
        %v598 = vld [vmem:[%s597] ss:$2 sm:$0xff]
        %s599 = scalar_lea.vmem [#allocation2], 8
        %v600 = vld [vmem:[%s599] ss:$2 sm:$0xff]
        %s601 = scalar_lea.vmem [#allocation2], 32
        %v602 = vld [vmem:[%s601] ss:$2 sm:$0xff]
        %s603 = scalar_lea.vmem [#allocation2], 56
        %v604 = vld [vmem:[%s603] ss:$2 sm:$0xff]
        %s605 = scalar_lea.vmem [#allocation2], 80
        %v606 = vld [vmem:[%s605] ss:$2 sm:$0xff]
        %s607 = scalar_lea.vmem [#allocation2], 104
        %v608 = vld [vmem:[%s607] ss:$2 sm:$0xff]
        %s609 = scalar_lea.vmem [#allocation2], 128
        %v610 = vld [vmem:[%s609] ss:$2 sm:$0xff]
        %s611 = scalar_lea.vmem [#allocation2], 152
        %v612 = vld [vmem:[%s611] ss:$2 sm:$0xff]
        %s613 = scalar_lea.vmem [#allocation2], 176
        %v614 = vld [vmem:[%s613] ss:$2 sm:$0xff]
        %s615 = scalar_lea.vmem [#allocation2], 200
        %v616 = vld [vmem:[%s615] ss:$2 sm:$0xff]
        %s617 = scalar_lea.vmem [#allocation2], 224
        %v618 = vld [vmem:[%s617] ss:$2 sm:$0xff]
        %s619 = scalar_lea.vmem [#allocation2], 248
        %v620 = vld [vmem:[%s619] ss:$2 sm:$0xff]
        %s621 = scalar_lea.vmem [#allocation2], 272
        %v622 = vld [vmem:[%s621] ss:$2 sm:$0xff]
        %s623 = scalar_lea.vmem [#allocation2], 296
        %v624 = vld [vmem:[%s623] ss:$2 sm:$0xff]
        %s625 = scalar_lea.vmem [#allocation2], 320
        %v626 = vld [vmem:[%s625] ss:$2 sm:$0xff]
        %s627 = scalar_lea.vmem [#allocation2], 344
        %v628 = vld [vmem:[%s627] ss:$2 sm:$0xff]
        %s629 = scalar_lea.vmem [#allocation2], 368
        %v630 = vld [vmem:[%s629] ss:$2 sm:$0xff]
        %s631 = scalar_lea.vmem [#allocation2], 9
        %v632 = vld [vmem:[%s631] ss:$2 sm:$0xff]
        %s633 = scalar_lea.vmem [#allocation2], 33
        %v634 = vld [vmem:[%s633] ss:$2 sm:$0xff]
        %s635 = scalar_lea.vmem [#allocation2], 57
        %v636 = vld [vmem:[%s635] ss:$2 sm:$0xff]
        %s637 = scalar_lea.vmem [#allocation2], 81
        %v638 = vld [vmem:[%s637] ss:$2 sm:$0xff]
        %s639 = scalar_lea.vmem [#allocation2], 105
        %v640 = vld [vmem:[%s639] ss:$2 sm:$0xff]
        %s641 = scalar_lea.vmem [#allocation2], 129
        %v642 = vld [vmem:[%s641] ss:$2 sm:$0xff]
        %s643 = scalar_lea.vmem [#allocation2], 153
        %v644 = vld [vmem:[%s643] ss:$2 sm:$0xff]
        %s645 = scalar_lea.vmem [#allocation2], 177
        %v646 = vld [vmem:[%s645] ss:$2 sm:$0xff]
        %s647 = scalar_lea.vmem [#allocation2], 201
        %v648 = vld [vmem:[%s647] ss:$2 sm:$0xff]
        %s649 = scalar_lea.vmem [#allocation2], 225
        %v650 = vld [vmem:[%s649] ss:$2 sm:$0xff]
        %s651 = scalar_lea.vmem [#allocation2], 249
        %v652 = vld [vmem:[%s651] ss:$2 sm:$0xff]
        %s653 = scalar_lea.vmem [#allocation2], 273
        %v654 = vld [vmem:[%s653] ss:$2 sm:$0xff]
        %s655 = scalar_lea.vmem [#allocation2], 297
        %v656 = vld [vmem:[%s655] ss:$2 sm:$0xff]
        %s657 = scalar_lea.vmem [#allocation2], 321
        %v658 = vld [vmem:[%s657] ss:$2 sm:$0xff]
        %s659 = scalar_lea.vmem [#allocation2], 345
        %v660 = vld [vmem:[%s659] ss:$2 sm:$0xff]
        %s661 = scalar_lea.vmem [#allocation2], 369
        %v662 = vld [vmem:[%s661] ss:$2 sm:$0xff]
        %663 = vst.msk [vmem:[#allocation3] sm:$0xff] %vm518, -inf
        %v664 = vmax.f32 %v568, %v600
        %v665 = vmax.f32 %v570, %v602
        %v666 = vmax.f32 %v572, %v604
        %v667 = vmax.f32 %v574, %v606
        %v668 = vmax.f32 %v576, %v608
        %v669 = vmax.f32 %v578, %v610
        %v670 = vmax.f32 %v580, %v612
        %v671 = vmax.f32 %v582, %v614
        %v672 = vmax.f32 %v584, %v616
        %v673 = vmax.f32 %v586, %v618
        %v674 = vmax.f32 %v588, %v620
        %v675 = vmax.f32 %v590, %v622
        %v676 = vmax.f32 %v592, %v624
        %v677 = vmax.f32 %v594, %v626
        %v678 = vmax.f32 %v596, %v628
        %v679 = vmax.f32 %v598, %v630
        %v680 = vmax.f32 %v664, %v632
        %v681 = vmax.f32 %v665, %v634
        %v682 = vmax.f32 %v666, %v636
        %v683 = vmax.f32 %v667, %v638
        %v684 = vmax.f32 %v668, %v640
        %v685 = vmax.f32 %v669, %v642
        %v686 = vmax.f32 %v670, %v644
        %v687 = vmax.f32 %v671, %v646
        %v688 = vmax.f32 %v672, %v648
        %v689 = vmax.f32 %v673, %v650
        %v690 = vmax.f32 %v674, %v652
        %v691 = vmax.f32 %v675, %v654
        %v692 = vmax.f32 %v676, %v656
        %v693 = vmax.f32 %v677, %v658
        %v694 = vmax.f32 %v678, %v660
        %v695 = vmax.f32 %v679, %v662
        %s696 = scalar_lea.vmem [#allocation3], 8
        %697 = vst.msk [vmem:[%s696] sm:$0xff] %vm518, %v680
        %698 = vst.msk [vmem:[%s696 + $0x8] sm:$0xff] %vm518, %v681
        %699 = vst.msk [vmem:[%s696 + $0x10] sm:$0xff] %vm518, %v682
        %700 = vst.msk [vmem:[%s696 + $0x18] sm:$0xff] %vm518, %v683
        %701 = vst.msk [vmem:[%s696 + $0x20] sm:$0xff] %vm518, %v684
        %702 = vst.msk [vmem:[%s696 + $0x28] sm:$0xff] %vm518, %v685
        %703 = vst.msk [vmem:[%s696 + $0x30] sm:$0xff] %vm518, %v686
        %704 = vst.msk [vmem:[%s696 + $0x38] sm:$0xff] %vm518, %v687
        %705 = vst.msk [vmem:[%s696 + $0x40] sm:$0xff] %vm518, %v688
        %706 = vst.msk [vmem:[%s696 + $0x48] sm:$0xff] %vm518, %v689
        %707 = vst.msk [vmem:[%s696 + $0x50] sm:$0xff] %vm518, %v690
        %708 = vst.msk [vmem:[%s696 + $0x58] sm:$0xff] %vm518, %v691
        %709 = vst.msk [vmem:[%s696 + $0x60] sm:$0xff] %vm518, %v692
        %710 = vst.msk [vmem:[%s696 + $0x68] sm:$0xff] %vm518, %v693
        %711 = vst.msk [vmem:[%s696 + $0x70] sm:$0xff] %vm518, %v694
        %712 = vst.msk [vmem:[%s696 + $0x78] sm:$0xff] %vm518, %v695
        %v713 = vld [vmem:[#allocation3] sm:$0xff]
        %v714 = vld [vmem:[%s696] sm:$0xff]
        %s715 = scalar_lea.vmem [#allocation3], 16
        %v716 = vld [vmem:[%s715] sm:$0xff]
        %v717 = vmax.f32 %v713, %v714
        %v718 = vmax.f32 %v717, %v716
        %719 = vst.msk [vmem:[%s163] sm:$0xff] %vm518, %v718
        %v720 = vld [vmem:[%s715] sm:$0xff]
        %s721 = scalar_lea.vmem [#allocation3], 24
        %v722 = vld [vmem:[%s721] sm:$0xff]
        %s723 = scalar_lea.vmem [#allocation3], 32
        %v724 = vld [vmem:[%s723] sm:$0xff]
        %v725 = vmax.f32 %v720, %v722
        %v726 = vmax.f32 %v725, %v724
        %727 = vst.msk [vmem:[%s163 + $0x8] sm:$0xff] %vm518, %v726
        %v728 = vld [vmem:[%s723] sm:$0xff]
        %s729 = scalar_lea.vmem [#allocation3], 40
        %v730 = vld [vmem:[%s729] sm:$0xff]
        %s731 = scalar_lea.vmem [#allocation3], 48
        %v732 = vld [vmem:[%s731] sm:$0xff]
        %v733 = vmax.f32 %v728, %v730
        %v734 = vmax.f32 %v733, %v732
        %735 = vst.msk [vmem:[%s163 + $0x10] sm:$0xff] %vm518, %v734
        %v736 = vld [vmem:[%s731] sm:$0xff]
        %s737 = scalar_lea.vmem [#allocation3], 56
        %v738 = vld [vmem:[%s737] sm:$0xff]
        %s739 = scalar_lea.vmem [#allocation3], 64
        %v740 = vld [vmem:[%s739] sm:$0xff]
        %v741 = vmax.f32 %v736, %v738
        %v742 = vmax.f32 %v741, %v740
        %743 = vst.msk [vmem:[%s163 + $0x18] sm:$0xff] %vm518, %v742
        %v744 = vld [vmem:[%s739] sm:$0xff]
        %s745 = scalar_lea.vmem [#allocation3], 72
        %v746 = vld [vmem:[%s745] sm:$0xff]
        %s747 = scalar_lea.vmem [#allocation3], 80
        %v748 = vld [vmem:[%s747] sm:$0xff]
        %v749 = vmax.f32 %v744, %v746
        %v750 = vmax.f32 %v749, %v748
        %751 = vst.msk [vmem:[%s163 + $0x20] sm:$0xff] %vm518, %v750
        %v752 = vld [vmem:[%s747] sm:$0xff]
        %s753 = scalar_lea.vmem [#allocation3], 88
        %v754 = vld [vmem:[%s753] sm:$0xff]
        %s755 = scalar_lea.vmem [#allocation3], 96
        %v756 = vld [vmem:[%s755] sm:$0xff]
        %v757 = vmax.f32 %v752, %v754
        %v758 = vmax.f32 %v757, %v756
        %759 = vst.msk [vmem:[%s163 + $0x28] sm:$0xff] %vm518, %v758
        %v760 = vld [vmem:[%s755] sm:$0xff]
        %s761 = scalar_lea.vmem [#allocation3], 104
        %v762 = vld [vmem:[%s761] sm:$0xff]
        %s763 = scalar_lea.vmem [#allocation3], 112
        %v764 = vld [vmem:[%s763] sm:$0xff]
        %v765 = vmax.f32 %v760, %v762
        %v766 = vmax.f32 %v765, %v764
        %767 = vst.msk [vmem:[%s163 + $0x30] sm:$0xff] %vm518, %v766
        %v768 = vld [vmem:[%s763] sm:$0xff]
        %s769 = scalar_lea.vmem [#allocation3], 120
        %v770 = vld [vmem:[%s769] sm:$0xff]
        %s771 = scalar_lea.vmem [#allocation3], 128
        %v772 = vld [vmem:[%s771] sm:$0xff]
        %v773 = vmax.f32 %v768, %v770
        %v774 = vmax.f32 %v773, %v772
        %775 = vst.msk [vmem:[%s163 + $0x38] sm:$0xff] %vm518, %v774
        %p776 = scmp.lt.s32.totalorder %s16, 1
        %s777 = scalar_select %p776, %s16, 1
        %s778 = smul.addr %s777, 8
        %s779 = smul.addr %s778, 8
        %s780 = scalar_lea.vmem %s2, %s779
        // Predicated region
        $region33: #{tpu_custom_call.1} parent=27 // pred_check
          %p781 = pneg %p81
        $region34: #{tpu_custom_call.1} parent=27 // pred_check_branch
          %783 = sbr.rel (%p781) target = $region36
        $region35: #{tpu_custom_call.1} parent=27 // pred_region
          _
        $region36: #{tpu_custom_call.1} parent=27 // pred_fallthru
          _
      $region28: #{tpu_custom_call.1} parent=5 // pred_fallthru
        _
      %p784 = scmp.le.s32.totalorder 2, %s11
      // Predicated region
      $region37: #{tpu_custom_call.1} parent=5 // pred_check
        %p785 = pneg %p784
      $region38: #{tpu_custom_call.1} parent=5 // pred_check_branch
        %787 = sbr.rel (%p785) target = $region40
      $region39: #{tpu_custom_call.1} parent=5 // pred_region
        %s788 = ssub.s32 %s11, 2
        // Predicated region
        $region41: #{tpu_custom_call.1} parent=39 // pred_check
          %p789 = pneg %p87
        $region42: #{tpu_custom_call.1} parent=39 // pred_check_branch
          %791 = sbr.rel (%p789) target = $region44
        $region43: #{tpu_custom_call.1} parent=39 // pred_region
          %p792 = scmp.lt.s32.totalorder %s17, 1
          %s793 = scalar_select %p792, %s17, 1
          %s794 = smul.addr %s793, 8
          %s795 = smul.addr %s794, 8
          %s796 = scalar_lea.vmem %s2, %s795
        $region44: #{tpu_custom_call.1} parent=39 // pred_fallthru
          _
      $region40: #{tpu_custom_call.1} parent=5 // pred_fallthru
        _
    $region6: #{tpu_custom_call.1} parent=1 // loop_footer
      %s15 = sadd.s32 1, %s11
    $region7: #{tpu_custom_call.1} parent=1 // loop_footer_branch
      %10 = sbr.rel target = $region3
    $region8: #{tpu_custom_call.1} parent=1 // loop_exit
      _
    %797 = vsyncpa [#allocation5], 1
    %s798 = scalar_lea.sflag [#allocation5], 1
    %799 = vsyncpa %s798, 1

</llo_original>
